<compile_context>
chip_gen: v5e
topology: v5e:2x2
jax: 0.10.0
libtpu: 0.0.40
codegen_flags: <defaults>
</compile_context>

<pallas_src>
import math

import jax
import jax.numpy as jnp
from jax.experimental import pallas as pl
from jax.experimental.pallas import tpu as pltpu


HIDDEN = 64          # logical hidden width (PyTorch module)
HIDDEN_PAD = 128     # lane-dense padded hidden width
LANE = 128
VMEM_BUDGET = 48 * 1024 * 1024   # stay well under v7x's 64 MiB physical VMEM


def _round_up(n, m):
    return ((n + m - 1) // m) * m


def _cdiv(a, b):
    return -(-a // b)


# ---------------------------------------------------------------------------
# Kernel
# ---------------------------------------------------------------------------
def actor_critic_kernel(
    x_ref,            # (bm, input_dim)          stored dtype (f32)
    w1_ref, b1_ref,   # (input_dim, 128) cdtype  / (1, 128) f32
    w2_ref, b2_ref,   # (128, 128)       cdtype  / (1, 128) f32
    wh_ref, bh_ref,   # (128, head_pad)  cdtype  / (1, head_pad) f32
    out_ref,          # (bm, head_pad)   f32   — fused [policy_logits | value | pad]
):
    # Cast x to the matmul operand dtype on the VPU (no wrapper-side cast).
    x = x_ref[...].astype(w1_ref.dtype)

    # shared layer 1: Linear (+bias, ReLU in f32)
    h1 = jnp.dot(x, w1_ref[...], preferred_element_type=jnp.float32) + b1_ref[...]
    h1 = jnp.maximum(h1, 0.0)

    # shared layer 2
    h2 = (
        jnp.dot(h1.astype(w2_ref.dtype), w2_ref[...],
                preferred_element_type=jnp.float32)
        + b2_ref[...]
    )
    h2 = jnp.maximum(h2, 0.0)

    # fused policy + value head: one MXU pass, one lane-dense output slab
    out = (
        jnp.dot(h2.astype(wh_ref.dtype), wh_ref[...],
                preferred_element_type=jnp.float32)
        + bh_ref[...]
    )
    out_ref[...] = out.astype(out_ref.dtype)


# ---------------------------------------------------------------------------
# One-time weight preparation (hoisted out of the forward hot path)
# ---------------------------------------------------------------------------
def prepare_params(params, compute_dtype=jnp.bfloat16):
    """Fuse policy+value heads, zero-pad to lane-dense widths, cast once."""
    input_dim = params["w1"].shape[0]
    output_dim = params["wp"].shape[1]
    head_pad = _round_up(output_dim + 1, LANE)

    def pad_to(a, shape):
        return jnp.pad(a, [(0, t - s) for s, t in zip(a.shape, shape)])

    w1 = pad_to(params["w1"], (input_dim, HIDDEN_PAD)).astype(compute_dtype)
    b1 = pad_to(params["b1"], (1, HIDDEN_PAD)).astype(jnp.float32)
    w2 = pad_to(params["w2"], (HIDDEN_PAD, HIDDEN_PAD)).astype(compute_dtype)
    b2 = pad_to(params["b2"], (1, HIDDEN_PAD)).astype(jnp.float32)

    wh = jnp.concatenate([params["wp"], params["wv"]], axis=1)     # (64, out+1)
    bh = jnp.concatenate([params["bp"], params["bv"]], axis=1)     # (1,  out+1)
    wh = pad_to(wh, (HIDDEN_PAD, head_pad)).astype(compute_dtype)
    bh = pad_to(bh, (1, head_pad)).astype(jnp.float32)

    return dict(
        w1=w1, b1=b1, w2=w2, b2=b2, wh=wh, bh=bh,
        input_dim=input_dim, output_dim=output_dim, head_pad=head_pad,
    )


# ---------------------------------------------------------------------------
# Forward wrapper
# ---------------------------------------------------------------------------
def actor_critic_forward(x, prepped, *, block_batch=512):
    """ActorCritic forward via a Pallas TPU kernel.

    x: (batch, input_dim) float32.
    prepped: output of prepare_params() (pre-fused, pre-padded, pre-cast).
    Returns (policy_logits, value): (batch, output_dim), (batch, 1) float32.
    """
    batch, input_dim = x.shape
    assert input_dim == prepped["input_dim"]
    output_dim = prepped["output_dim"]
    head_pad = prepped["head_pad"]

    w1, b1 = prepped["w1"], prepped["b1"]
    w2, b2 = prepped["w2"], prepped["b2"]
    wh, bh = prepped["wh"], prepped["bh"]

    # --- batch tiling: balanced tiles, >=2 grid steps for v7x megacore ------
    batch8 = _round_up(batch, 8)
    num_tiles = max(1, _cdiv(batch8, block_batch))
    if batch8 > 256:
        num_tiles = max(num_tiles, 2)          # let v7x's 2 TCs each get work
    bm = _round_up(_cdiv(batch8, num_tiles), 8)

    weight_bytes = sum(
        int(a.size) * a.dtype.itemsize for a in (w1, b1, w2, b2, wh, bh)
    )

    def vmem_estimate(bm_):
        # double-buffered x tile + output tile, plus (2x-buffered) weights
        return (2 * bm_ * input_dim * x.dtype.itemsize
                + 2 * bm_ * head_pad * 4
                + 2 * weight_bytes)

    # Shrink bm if the resident-VMEM estimate would blow the (v7x-safe) budget.
    while vmem_estimate(bm) > VMEM_BUDGET and bm > 8:
        bm = _round_up(bm // 2, 8)
    num_tiles = _cdiv(batch8, bm)
    padded_batch = bm * num_tiles

    if padded_batch != batch:
        x = jnp.pad(x, ((0, padded_batch - batch), (0, 0)))
    grid = (num_tiles,)

    vmem_limit = int(min(64 * 1024 * 1024,
                         max(16 * 1024 * 1024, 2 * vmem_estimate(bm))))

    flops = 2 * padded_batch * (input_dim * HIDDEN_PAD
                                + HIDDEN_PAD * HIDDEN_PAD
                                + HIDDEN_PAD * head_pad)
    bytes_accessed = (padded_batch * input_dim * x.dtype.itemsize
                      + weight_bytes
                      + padded_batch * head_pad * 4)

    def rep(shape):
        # Small weights/biases: passed whole, resident across the grid.
        return pl.BlockSpec(shape, lambda i: (0, 0))

    out = pl.pallas_call(
        actor_critic_kernel,
        out_shape=jax.ShapeDtypeStruct((padded_batch, head_pad), jnp.float32),
        grid_spec=pltpu.PrefetchScalarGridSpec(
            num_scalar_prefetch=0,
            grid=grid,
            in_specs=[
                pl.BlockSpec((bm, input_dim), lambda i: (i, 0)),        # x tile
                rep((input_dim, HIDDEN_PAD)), rep((1, HIDDEN_PAD)),     # W1, b1
                rep((HIDDEN_PAD, HIDDEN_PAD)), rep((1, HIDDEN_PAD)),    # W2, b2
                rep((HIDDEN_PAD, head_pad)), rep((1, head_pad)),        # Wh, bh
            ],
            out_specs=pl.BlockSpec((bm, head_pad), lambda i: (i, 0)),
        ),
        compiler_params=pltpu.CompilerParams(
            dimension_semantics=("parallel",),
            vmem_limit_bytes=vmem_limit,
        ),
        cost_estimate=pl.CostEstimate(
            flops=flops, transcendentals=0, bytes_accessed=bytes_accessed),
    )(x, w1, b1, w2, b2, wh, bh)

    out = out[:batch]
    return out[:, :output_dim], out[:, output_dim:output_dim + 1]


# ---------------------------------------------------------------------------
# Init + pure-JAX reference
# ---------------------------------------------------------------------------
def init_params(key, input_dim, output_dim):
    """Mimics PyTorch nn.Linear default init (uniform +/- 1/sqrt(fan_in))."""
    def linear(k, fan_in, fan_out):
        kw, kb = jax.random.split(k)
        bound = 1.0 / math.sqrt(fan_in)
        # Stored as (in, out) — transposed relative to PyTorch's (out, in).
        w = jax.random.uniform(kw, (fan_in, fan_out), jnp.float32, -bound, bound)
        b = jax.random.uniform(kb, (1, fan_out), jnp.float32, -bound, bound)
        return w, b

    k1, k2, k3, k4 = jax.random.split(key, 4)
    w1, b1 = linear(k1, input_dim, HIDDEN)
    w2, b2 = linear(k2, HIDDEN, HIDDEN)
    wp, bp = linear(k3, HIDDEN, output_dim)
    wv, bv = linear(k4, HIDDEN, 1)
    return dict(w1=w1, b1=b1, w2=w2, b2=b2, wp=wp, bp=bp, wv=wv, bv=bv)


def reference_forward(x, params):
    h1 = jnp.maximum(x @ params["w1"] + params["b1"], 0.0)
    h2 = jnp.maximum(h1 @ params["w2"] + params["b2"], 0.0)
    return h2 @ params["wp"] + params["bp"], h2 @ params["wv"] + params["bv"]


# ---------------------------------------------------------------------------
if __name__ == "__main__":
    BATCH, INPUT_DIM, OUTPUT_DIM = 16, 32, 8

    key = jax.random.PRNGKey(0)
    kx, kp = jax.random.split(key)
    x = jax.random.normal(kx, (BATCH, INPUT_DIM), jnp.float32)
    params = init_params(kp, INPUT_DIM, OUTPUT_DIM)

    ref_logits, ref_value = reference_forward(x, params)

    # Weight prep hoisted out of the forward path (done once).
    prepped_f32 = prepare_params(params, compute_dtype=jnp.float32)
    prepped_bf16 = prepare_params(params, compute_dtype=jnp.bfloat16)

    # f32 matmul-operand path (strict correctness check).
    logits, value = actor_critic_forward(x, prepped_f32)
    jax.block_until_ready((logits, value))
    assert logits.shape == (BATCH, OUTPUT_DIM)
    assert value.shape == (BATCH, 1)
    assert jnp.allclose(logits, ref_logits, atol=1e-4, rtol=1e-4)
    assert jnp.allclose(value, ref_value, atol=1e-4, rtol=1e-4)

    # bf16 matmul-operand path (default perf path), relaxed tolerance.
    logits_bf, value_bf = actor_critic_forward(x, prepped_bf16)
    jax.block_until_ready((logits_bf, value_bf))
    assert jnp.allclose(logits_bf, ref_logits, atol=5e-2, rtol=5e-2)
    assert jnp.allclose(value_bf, ref_value, atol=5e-2, rtol=5e-2)

    # Ragged-batch path (batch not a multiple of 8): padded internally.
    x_odd = x[:13]
    lo, vo = actor_critic_forward(x_odd, prepped_f32)
    jax.block_until_ready((lo, vo))
    assert lo.shape == (13, OUTPUT_DIM) and vo.shape == (13, 1)
    assert jnp.allclose(lo, ref_logits[:13], atol=1e-4, rtol=1e-4)
    assert jnp.allclose(vo, ref_value[:13], atol=1e-4, rtol=1e-4)

    print("KERNEL_OK")
</pallas_src>

<mosaic_0001>
module attributes {stable_mosaic.version = 11 : i64} {
  func.func @actor_critic_kernel(%arg0: i32, %arg1: memref<16x32xf32, #tpu.memory_space<vmem>>, %arg2: memref<32x128xf32, #tpu.memory_space<vmem>>, %arg3: memref<1x128xf32, #tpu.memory_space<vmem>>, %arg4: memref<128x128xf32, #tpu.memory_space<vmem>>, %arg5: memref<1x128xf32, #tpu.memory_space<vmem>>, %arg6: memref<128x128xf32, #tpu.memory_space<vmem>>, %arg7: memref<1x128xf32, #tpu.memory_space<vmem>>, %arg8: memref<16x128xf32, #tpu.memory_space<vmem>>) attributes {dimension_semantics = [#tpu.dimension_semantics<parallel>], iteration_bounds = array<i64: 1>, scalar_prefetch = 0 : i64, scratch_operands = 0 : i64, tpu.core_type = #tpu.core_type<tc>, window_params = [{transform_indices = @transform_0, window_bounds = array<i64: 16, 32>}, {pipeline_mode = #tpu.pipeline_mode<synchronous>, transform_indices = @transform_1, window_bounds = array<i64: 32, 128>}, {pipeline_mode = #tpu.pipeline_mode<synchronous>, transform_indices = @transform_2, window_bounds = array<i64: 1, 128>}, {pipeline_mode = #tpu.pipeline_mode<synchronous>, transform_indices = @transform_3, window_bounds = array<i64: 128, 128>}, {pipeline_mode = #tpu.pipeline_mode<synchronous>, transform_indices = @transform_4, window_bounds = array<i64: 1, 128>}, {pipeline_mode = #tpu.pipeline_mode<synchronous>, transform_indices = @transform_5, window_bounds = array<i64: 128, 128>}, {pipeline_mode = #tpu.pipeline_mode<synchronous>, transform_indices = @transform_6, window_bounds = array<i64: 1, 128>}, {transform_indices = @transform_7, window_bounds = array<i64: 16, 128>}]} {
    %c0 = arith.constant 0 : index
    %c0_0 = arith.constant 0 : index
    %0 = vector.load %arg1[%c0, %c0_0] : memref<16x32xf32, #tpu.memory_space<vmem>>, vector<16x32xf32>
    %c0_1 = arith.constant 0 : index
    %c0_2 = arith.constant 0 : index
    %1 = vector.load %arg2[%c0_1, %c0_2] : memref<32x128xf32, #tpu.memory_space<vmem>>, vector<32x128xf32>
    %cst = arith.constant dense<0.000000e+00> : vector<16x128xf32>
    %2 = tpu.matmul %0, %1, %cst {dimension_numbers = #tpu.dot_dimension_numbers<[1], [0], [0], [1], [0, 0, 1, 1], [], []>} : vector<16x32xf32>, vector<32x128xf32>, vector<16x128xf32> -> vector<16x128xf32>
    %c0_3 = arith.constant 0 : index
    %c0_4 = arith.constant 0 : index
    %3 = vector.load %arg3[%c0_3, %c0_4] : memref<1x128xf32, #tpu.memory_space<vmem>>, vector<1x128xf32>
    %4 = vector.broadcast %3 : vector<1x128xf32> to vector<16x128xf32>
    %5 = arith.addf %2, %4 : vector<16x128xf32>
    %cst_5 = arith.constant 0.000000e+00 : f32
    %6 = vector.broadcast %cst_5 : f32 to vector<16x128xf32>
    %7 = arith.maximumf %5, %6 : vector<16x128xf32>
    %c0_6 = arith.constant 0 : index
    %c0_7 = arith.constant 0 : index
    %8 = vector.load %arg4[%c0_6, %c0_7] : memref<128x128xf32, #tpu.memory_space<vmem>>, vector<128x128xf32>
    %cst_8 = arith.constant dense<0.000000e+00> : vector<16x128xf32>
    %9 = tpu.matmul %7, %8, %cst_8 {dimension_numbers = #tpu.dot_dimension_numbers<[1], [0], [0], [1], [0, 0, 1, 1], [], []>} : vector<16x128xf32>, vector<128x128xf32>, vector<16x128xf32> -> vector<16x128xf32>
    %c0_9 = arith.constant 0 : index
    %c0_10 = arith.constant 0 : index
    %10 = vector.load %arg5[%c0_9, %c0_10] : memref<1x128xf32, #tpu.memory_space<vmem>>, vector<1x128xf32>
    %11 = vector.broadcast %10 : vector<1x128xf32> to vector<16x128xf32>
    %12 = arith.addf %9, %11 : vector<16x128xf32>
    %cst_11 = arith.constant 0.000000e+00 : f32
    %13 = vector.broadcast %cst_11 : f32 to vector<16x128xf32>
    %14 = arith.maximumf %12, %13 : vector<16x128xf32>
    %c0_12 = arith.constant 0 : index
    %c0_13 = arith.constant 0 : index
    %15 = vector.load %arg6[%c0_12, %c0_13] : memref<128x128xf32, #tpu.memory_space<vmem>>, vector<128x128xf32>
    %cst_14 = arith.constant dense<0.000000e+00> : vector<16x128xf32>
    %16 = tpu.matmul %14, %15, %cst_14 {dimension_numbers = #tpu.dot_dimension_numbers<[1], [0], [0], [1], [0, 0, 1, 1], [], []>} : vector<16x128xf32>, vector<128x128xf32>, vector<16x128xf32> -> vector<16x128xf32>
    %c0_15 = arith.constant 0 : index
    %c0_16 = arith.constant 0 : index
    %17 = vector.load %arg7[%c0_15, %c0_16] : memref<1x128xf32, #tpu.memory_space<vmem>>, vector<1x128xf32>
    %18 = vector.broadcast %17 : vector<1x128xf32> to vector<16x128xf32>
    %19 = arith.addf %16, %18 : vector<16x128xf32>
    %c0_17 = arith.constant 0 : index
    %c0_18 = arith.constant 0 : index
    %20 = vector.load %arg8[%c0_17, %c0_18] : memref<16x128xf32, #tpu.memory_space<vmem>>, vector<16x128xf32>
    tpu.vector_store %arg8[%c0_17, %c0_18], %19 {strides = array<i32>} : memref<16x128xf32, #tpu.memory_space<vmem>>, vector<16x128xf32>,
    return
  }
  func.func @transform_0(%arg0: i32) -> (i32, i32) {
    %c0_i32 = arith.constant 0 : i32
    %c0_i32_0 = arith.constant 0 : i32
    return %arg0, %c0_i32 : i32, i32
  }
  func.func @transform_1(%arg0: i32) -> (i32, i32) {
    %c0_i32 = arith.constant 0 : i32
    %c0_i32_0 = arith.constant 0 : i32
    %c0_i32_1 = arith.constant 0 : i32
    return %c0_i32, %c0_i32_0 : i32, i32
  }
  func.func @transform_2(%arg0: i32) -> (i32, i32) {
    %c0_i32 = arith.constant 0 : i32
    %c0_i32_0 = arith.constant 0 : i32
    %c0_i32_1 = arith.constant 0 : i32
    return %c0_i32, %c0_i32_0 : i32, i32
  }
  func.func @transform_3(%arg0: i32) -> (i32, i32) {
    %c0_i32 = arith.constant 0 : i32
    %c0_i32_0 = arith.constant 0 : i32
    %c0_i32_1 = arith.constant 0 : i32
    return %c0_i32, %c0_i32_0 : i32, i32
  }
  func.func @transform_4(%arg0: i32) -> (i32, i32) {
    %c0_i32 = arith.constant 0 : i32
    %c0_i32_0 = arith.constant 0 : i32
    %c0_i32_1 = arith.constant 0 : i32
    return %c0_i32, %c0_i32_0 : i32, i32
  }
  func.func @transform_5(%arg0: i32) -> (i32, i32) {
    %c0_i32 = arith.constant 0 : i32
    %c0_i32_0 = arith.constant 0 : i32
    %c0_i32_1 = arith.constant 0 : i32
    return %c0_i32, %c0_i32_0 : i32, i32
  }
  func.func @transform_6(%arg0: i32) -> (i32, i32) {
    %c0_i32 = arith.constant 0 : i32
    %c0_i32_0 = arith.constant 0 : i32
    %c0_i32_1 = arith.constant 0 : i32
    return %c0_i32, %c0_i32_0 : i32, i32
  }
  func.func @transform_7(%arg0: i32) -> (i32, i32) {
    %c0_i32 = arith.constant 0 : i32
    %c0_i32_0 = arith.constant 0 : i32
    return %arg0, %c0_i32 : i32, i32
  }
}

</mosaic_0001>

<llo_original>
// kernel: tpu_custom_call.1
$region0: #{tpu_custom_call.1}
  #allocation0 [shape = 'u32[]', space=smem, size = 0x4, offset = 0x4, fixed_abs, tag = 'smem constant byte address 0x4 - core index']
  #allocation1 [shape = 'u32[72,128]{1,0:T(1,128)}', space=vmem, size = 0x9000, scoped, tag = 'internal scratch']
  %s0 = inlined_call_operand.hbm [shape: f32[16,32], index: 0, kind: input, shape index: {}]
  %s1 = inlined_call_operand.hbm [shape: f32[32,128], index: 1, kind: input, shape index: {}]
  %s2 = inlined_call_operand.vmem [shape: f32[1,128], index: 2, kind: input, shape index: {}]
  %s3 = inlined_call_operand.hbm [shape: f32[128,128], index: 3, kind: input, shape index: {}]
  %s4 = inlined_call_operand.vmem [shape: f32[1,128], index: 4, kind: input, shape index: {}]
  %s5 = inlined_call_operand.hbm [shape: f32[128,128], index: 5, kind: input, shape index: {}]
  %s6 = inlined_call_operand.vmem [shape: f32[1,128], index: 6, kind: input, shape index: {}]
  %s7 = inlined_call_operand.hbm [shape: f32[16,128], index: 7, kind: output, shape index: {}]
  %s8 = sld [smem:[#allocation0]]
  $region54: #{tpu_custom_call.1} parent=0
    _
  %s10 = ssub.s32 1, %s8
  %s11 = scalar_select 0, %s10, %s8
  $region1: #{tpu_custom_call.1} parent=0
    #allocation2 [shape = 'u8[8192]{0}', space=vmem, size = 0x2000, scoped, tag = 'input window, operand 0, single buffered']
    #allocation3 [shape = 's32[1]{0}', space=sflag, size = 0x4, scoped, tag = 'scoped memory for tpu_custom_call.1']
    #allocation4 [shape = 's32[1]{0}', space=sflag, size = 0x4, scoped, tag = 'scoped memory for tpu_custom_call.1']
    #allocation5 [shape = 'u8[16384]{0}', space=vmem, size = 0x4000, scoped, tag = 'input window, operand 1, single buffered']
    #allocation6 [shape = 's32[1]{0}', space=sflag, size = 0x4, scoped, tag = 'scoped memory for tpu_custom_call.1']
    #allocation7 [shape = 'u8[65536]{0}', space=vmem, size = 0x10000, scoped, tag = 'input window, operand 3, single buffered']
    #allocation8 [shape = 'u8[65536]{0}', space=vmem, size = 0x10000, scoped, tag = 'input window, operand 5, single buffered']
    #allocation9 [shape = 's32[1]{0}', space=sflag, size = 0x4, scoped, tag = 'scoped memory for tpu_custom_call.1']
    #allocation10 [shape = 'u8[8192]{0}', space=vmem, size = 0x2000, scoped, tag = 'output window, operand 0, single buffered']
    %12 = vsyncpa [#allocation3], 0
    %13 = vsyncpa [#allocation6], 0
    %14 = vsyncpa [#allocation9], 0
    %15 = vsyncpa [#allocation4], 0
    // Predicated region
    $region2: #{tpu_custom_call.1} parent=1 // pred_check
      _
    $region3: #{tpu_custom_call.1} parent=1 // pred_check_branch
      %17 = sbr.rel (0) target = $region5
    $region4: #{tpu_custom_call.1} parent=1 // pred_region
      %19 = vsyncadd [#allocation3], 0
      %s20 = sshll.u32 %s0, 4
      %s21 = int_to_ptr.hbm [resolvable:$true] %s20
      %s22 = sshll.u32 [#allocation2], 4
      %s23 = int_to_ptr.vmem [resolvable:$true] %s22
      %28 = dma.hbm_to_vmem [thread:$0]  %s21, 256, %s23, [#allocation3], 128, 128, 8
    $region5: #{tpu_custom_call.1} parent=1 // pred_fallthru
      _
    // Predicated region
    $region6: #{tpu_custom_call.1} parent=1 // pred_check
      _
    $region7: #{tpu_custom_call.1} parent=1 // pred_check_branch
      %30 = sbr.rel (0) target = $region9
    $region8: #{tpu_custom_call.1} parent=1 // pred_region
      %32 = vsyncadd [#allocation6], 0
      %s33 = sshll.u32 %s1, 4
      %s34 = int_to_ptr.hbm [resolvable:$true] %s33
      %s35 = sshll.u32 [#allocation5], 4
      %s36 = int_to_ptr.vmem [resolvable:$true] %s35
      %41 = dma.hbm_to_vmem [thread:$0]  %s34, 512, %s36, [#allocation6], 128, 128, 8
    $region9: #{tpu_custom_call.1} parent=1 // pred_fallthru
      _
    // Predicated region
    $region10: #{tpu_custom_call.1} parent=1 // pred_check
      _
    $region11: #{tpu_custom_call.1} parent=1 // pred_check_branch
      %43 = sbr.rel (0) target = $region13
    $region12: #{tpu_custom_call.1} parent=1 // pred_region
      _
    $region13: #{tpu_custom_call.1} parent=1 // pred_fallthru
      _
    // Predicated region
    $region14: #{tpu_custom_call.1} parent=1 // pred_check
      _
    $region15: #{tpu_custom_call.1} parent=1 // pred_check_branch
      %45 = sbr.rel (0) target = $region17
    $region16: #{tpu_custom_call.1} parent=1 // pred_region
      %47 = vsyncadd [#allocation6], 0
      %s48 = sshll.u32 %s3, 4
      %s49 = int_to_ptr.hbm [resolvable:$true] %s48
      %s50 = sshll.u32 [#allocation7], 4
      %s51 = int_to_ptr.vmem [resolvable:$true] %s50
      %56 = dma.hbm_to_vmem [thread:$0]  %s49, 2048, %s51, [#allocation6], 128, 128, 8
    $region17: #{tpu_custom_call.1} parent=1 // pred_fallthru
      _
    // Predicated region
    $region18: #{tpu_custom_call.1} parent=1 // pred_check
      _
    $region19: #{tpu_custom_call.1} parent=1 // pred_check_branch
      %58 = sbr.rel (0) target = $region21
    $region20: #{tpu_custom_call.1} parent=1 // pred_region
      _
    $region21: #{tpu_custom_call.1} parent=1 // pred_fallthru
      _
    // Predicated region
    $region22: #{tpu_custom_call.1} parent=1 // pred_check
      _
    $region23: #{tpu_custom_call.1} parent=1 // pred_check_branch
      %60 = sbr.rel (0) target = $region25
    $region24: #{tpu_custom_call.1} parent=1 // pred_region
      %62 = vsyncadd [#allocation9], 0
      %s63 = sshll.u32 %s5, 4
      %s64 = int_to_ptr.hbm [resolvable:$true] %s63
      %s65 = sshll.u32 [#allocation8], 4
      %s66 = int_to_ptr.vmem [resolvable:$true] %s65
      %71 = dma.hbm_to_vmem [thread:$0]  %s64, 2048, %s66, [#allocation9], 128, 128, 8
    $region25: #{tpu_custom_call.1} parent=1 // pred_fallthru
      _
    // Predicated region
    $region26: #{tpu_custom_call.1} parent=1 // pred_check
      _
    $region27: #{tpu_custom_call.1} parent=1 // pred_check_branch
      %73 = sbr.rel (0) target = $region29
    $region28: #{tpu_custom_call.1} parent=1 // pred_region
      _
    $region29: #{tpu_custom_call.1} parent=1 // pred_fallthru
      _
    // Predicated region
    $region30: #{tpu_custom_call.1} parent=1 // pred_check
      _
    $region31: #{tpu_custom_call.1} parent=1 // pred_check_branch
      %75 = sbr.rel (0) target = $region33
    $region32: #{tpu_custom_call.1} parent=1 // pred_region
      %77 = dma.done [#allocation3], 256
    $region33: #{tpu_custom_call.1} parent=1 // pred_fallthru
      _
    // Predicated region
    $region34: #{tpu_custom_call.1} parent=1 // pred_check
      _
    $region35: #{tpu_custom_call.1} parent=1 // pred_check_branch
      %79 = sbr.rel (0) target = $region37
    $region36: #{tpu_custom_call.1} parent=1 // pred_region
      %81 = dma.done [#allocation6], 512
    $region37: #{tpu_custom_call.1} parent=1 // pred_fallthru
      _
    // Predicated region
    $region38: #{tpu_custom_call.1} parent=1 // pred_check
      _
    $region39: #{tpu_custom_call.1} parent=1 // pred_check_branch
      %83 = sbr.rel (0) target = $region41
    $region40: #{tpu_custom_call.1} parent=1 // pred_region
      %85 = dma.done [#allocation6], 2048
    $region41: #{tpu_custom_call.1} parent=1 // pred_fallthru
      _
    // Predicated region
    $region42: #{tpu_custom_call.1} parent=1 // pred_check
      _
    $region43: #{tpu_custom_call.1} parent=1 // pred_check_branch
      %87 = sbr.rel (0) target = $region45
    $region44: #{tpu_custom_call.1} parent=1 // pred_region
      %89 = dma.done [#allocation9], 2048
    $region45: #{tpu_custom_call.1} parent=1 // pred_fallthru
      _
    %v90 = vld [vmem:[#allocation2] sm:$0xff]
    %v91 = vld [vmem:[#allocation2 + $0x8] sm:$0xff]
    %v92 = vld [vmem:[#allocation5] sm:$0xff]
    %v93 = vld [vmem:[#allocation5 + $0x8] sm:$0xff]
    %v94 = vld [vmem:[#allocation5 + $0x10] sm:$0xff]
    %v95 = vld [vmem:[#allocation5 + $0x18] sm:$0xff]
    %v96 = vld [vmem:[%s2] sm:$0x1]
    %v98 = vperm.slane %v96, 0
    %vm100 = vcmask 261120
    %v102 = vsel %vm100, %v90, 0
    %v105 = vsel %vm100, %v91, 0
    %107 = vmatpush.msra.mxu0 0.0
    %108 = vmatpush.msra.mxu0 0.0
    %109 = vmatpush.msra.mxu0 0.0
    %110 = vmatpush.msra.mxu0 0.0
    %111 = vmatpush.msra.mxu0 0.0
    %112 = vmatpush.msra.mxu0 0.0
    %113 = vmatpush.msra.mxu0 0.0
    %114 = vmatpush.msra.mxu0 0.0
    %115 = vmatpush.msra.mxu0 0.0
    %116 = vmatpush.msra.mxu0 0.0
    %117 = vmatpush.msra.mxu0 0.0
    %118 = vmatpush.msra.mxu0 0.0
    %119 = vmatpush.msra.mxu0 %v95
    %120 = vmatpush.msra.mxu0 %v94
    %121 = vmatpush.msra.mxu0 %v93
    %122 = vmatpush.msra.mxu0 %v92
    %123 = vmatmul.f32.gmra.mxu0 %v102
    %v124 = vpop.f32.mrf.mxu0
    %v125 = vadd.f32 %v98, %v124
    %126 = vmatmul.f32.gmra.mxu0 %v105
    %v127 = vpop.f32.mrf.mxu0
    %v128 = vadd.f32 %v98, %v127
    %129 = vdwg.mxu0
    %v130 = vmax.f32 %v125, 0.0
    %v131 = vmax.f32 %v128, 0.0
    %v132 = vld [vmem:[#allocation7] sm:$0xff]
    %v133 = vld [vmem:[#allocation7 + $0x8] sm:$0xff]
    %v134 = vld [vmem:[#allocation7 + $0x10] sm:$0xff]
    %v135 = vld [vmem:[#allocation7 + $0x18] sm:$0xff]
    %v136 = vld [vmem:[#allocation7 + $0x20] sm:$0xff]
    %v137 = vld [vmem:[#allocation7 + $0x28] sm:$0xff]
    %v138 = vld [vmem:[#allocation7 + $0x30] sm:$0xff]
    %v139 = vld [vmem:[#allocation7 + $0x38] sm:$0xff]
    %v140 = vld [vmem:[#allocation7 + $0x40] sm:$0xff]
    %v141 = vld [vmem:[#allocation7 + $0x48] sm:$0xff]
    %v142 = vld [vmem:[#allocation7 + $0x50] sm:$0xff]
    %v143 = vld [vmem:[#allocation7 + $0x58] sm:$0xff]
    %v144 = vld [vmem:[#allocation7 + $0x60] sm:$0xff]
    %v145 = vld [vmem:[#allocation7 + $0x68] sm:$0xff]
    %v146 = vld [vmem:[#allocation7 + $0x70] sm:$0xff]
    %v147 = vld [vmem:[#allocation7 + $0x78] sm:$0xff]
    %v148 = vld [vmem:[%s4] sm:$0x1]
    %v150 = vperm.slane %v148, 0
    %152 = vmatpush.msra.mxu0 %v147
    %153 = vmatpush.msra.mxu0 %v146
    %154 = vmatpush.msra.mxu0 %v145
    %155 = vmatpush.msra.mxu0 %v144
    %156 = vmatpush.msra.mxu0 %v143
    %157 = vmatpush.msra.mxu0 %v142
    %158 = vmatpush.msra.mxu0 %v141
    %159 = vmatpush.msra.mxu0 %v140
    %160 = vmatpush.msra.mxu0 %v139
    %161 = vmatpush.msra.mxu0 %v138
    %162 = vmatpush.msra.mxu0 %v137
    %163 = vmatpush.msra.mxu0 %v136
    %164 = vmatpush.msra.mxu0 %v135
    %165 = vmatpush.msra.mxu0 %v134
    %166 = vmatpush.msra.mxu0 %v133
    %167 = vmatpush.msra.mxu0 %v132
    %168 = vmatmul.f32.gmra.mxu0 %v130
    %v169 = vpop.f32.mrf.mxu0
    %v170 = vadd.f32 %v150, %v169
    %171 = vmatmul.f32.gmra.mxu0 %v131
    %v172 = vpop.f32.mrf.mxu0
    %v173 = vadd.f32 %v150, %v172
    %174 = vdwg.mxu0
    %v175 = vmax.f32 %v170, 0.0
    %v176 = vmax.f32 %v173, 0.0
    %v177 = vld [vmem:[#allocation8] sm:$0xff]
    %v178 = vld [vmem:[#allocation8 + $0x8] sm:$0xff]
    %v179 = vld [vmem:[#allocation8 + $0x10] sm:$0xff]
    %v180 = vld [vmem:[#allocation8 + $0x18] sm:$0xff]
    %v181 = vld [vmem:[#allocation8 + $0x20] sm:$0xff]
    %v182 = vld [vmem:[#allocation8 + $0x28] sm:$0xff]
    %v183 = vld [vmem:[#allocation8 + $0x30] sm:$0xff]
    %v184 = vld [vmem:[#allocation8 + $0x38] sm:$0xff]
    %v185 = vld [vmem:[#allocation8 + $0x40] sm:$0xff]
    %v186 = vld [vmem:[#allocation8 + $0x48] sm:$0xff]
    %v187 = vld [vmem:[#allocation8 + $0x50] sm:$0xff]
    %v188 = vld [vmem:[#allocation8 + $0x58] sm:$0xff]
    %v189 = vld [vmem:[#allocation8 + $0x60] sm:$0xff]
    %v190 = vld [vmem:[#allocation8 + $0x68] sm:$0xff]
    %v191 = vld [vmem:[#allocation8 + $0x70] sm:$0xff]
    %v192 = vld [vmem:[#allocation8 + $0x78] sm:$0xff]
    %v193 = vld [vmem:[%s6] sm:$0x1]
    %v195 = vperm.slane %v193, 0
    %197 = vmatpush.msra.mxu0 %v192
    %198 = vmatpush.msra.mxu0 %v191
    %199 = vmatpush.msra.mxu0 %v190
    %200 = vmatpush.msra.mxu0 %v189
    %201 = vmatpush.msra.mxu0 %v188
    %202 = vmatpush.msra.mxu0 %v187
    %203 = vmatpush.msra.mxu0 %v186
    %204 = vmatpush.msra.mxu0 %v185
    %205 = vmatpush.msra.mxu0 %v184
    %206 = vmatpush.msra.mxu0 %v183
    %207 = vmatpush.msra.mxu0 %v182
    %208 = vmatpush.msra.mxu0 %v181
    %209 = vmatpush.msra.mxu0 %v180
    %210 = vmatpush.msra.mxu0 %v179
    %211 = vmatpush.msra.mxu0 %v178
    %212 = vmatpush.msra.mxu0 %v177
    %213 = vmatmul.f32.gmra.mxu0 %v175
    %v214 = vpop.f32.mrf.mxu0
    %v215 = vadd.f32 %v195, %v214
    %216 = vmatmul.f32.gmra.mxu0 %v176
    %v217 = vpop.f32.mrf.mxu0
    %v218 = vadd.f32 %v195, %v217
    %219 = vdwg.mxu0
    %220 = vst [vmem:[#allocation10] sm:$0xff] %v215
    %221 = vst [vmem:[#allocation10 + $0x8] sm:$0xff] %v218
    // Predicated region
    $region46: #{tpu_custom_call.1} parent=1 // pred_check
      _
    $region47: #{tpu_custom_call.1} parent=1 // pred_check_branch
      %223 = sbr.rel (0) target = $region49
    $region48: #{tpu_custom_call.1} parent=1 // pred_region
      %225 = vsyncadd [#allocation4], 0
      %s226 = sshll.u32 [#allocation10], 4
      %s227 = int_to_ptr.vmem [resolvable:$true] %s226
      %s228 = sshll.u32 %s7, 4
      %s229 = int_to_ptr.hbm [resolvable:$true] %s228
      %234 = dma.vmem_to_hbm [thread:$0]  %s227, 256, %s229, [#allocation4], 128, 128, 8
    $region49: #{tpu_custom_call.1} parent=1 // pred_fallthru
      _
    // Predicated region
    $region50: #{tpu_custom_call.1} parent=1 // pred_check
      _
    $region51: #{tpu_custom_call.1} parent=1 // pred_check_branch
      %236 = sbr.rel (0) target = $region53
    $region52: #{tpu_custom_call.1} parent=1 // pred_region
      %238 = dma.done [#allocation4], 256
    $region53: #{tpu_custom_call.1} parent=1 // pred_fallthru
      _
    %239 = vsyncpa [#allocation3], 1
    %240 = vsyncpa [#allocation6], 1
    %241 = vsyncpa [#allocation9], 1
    %242 = vsyncpa [#allocation4], 1

</llo_original>
